<compile_context>
chip_gen: v5e
topology: v5e:2x2
jax: 0.10.0
libtpu: 0.0.40
codegen_flags: <defaults>
</compile_context>

<pallas_src>
import math

import jax
import jax.numpy as jnp
from jax.experimental import pallas as pl
from jax.experimental.pallas import tpu as pltpu

# Force the same (accurate) matmul precision in the XLA reference path and the
# in-kernel dots so the numerics check is tight; production can use the default.
jax.config.update("jax_default_matmul_precision", "highest")

_VMEM_BUDGET = 28 * 1024 * 1024   # pipelined working-set budget (fits v6e/v7x 32 MiB default)
_VMEM_LIMIT = 32 * 1024 * 1024    # explicit scoped-VMEM limit (covers v5e's 16 MiB default)
_TM_CAP = 8192
_MIN_TILES = 4                    # keep >=4 row tiles so v7x megacore gets fed


def _round_up(x, m):
    return ((x + m - 1) // m) * m


def _choose_tm(m, row_bytes, resident_bytes):
    """Row-tile size for an (M, Hp)-tiled kernel.

    row_bytes:      VMEM bytes per row of the pipelined working set
                    (double-buffered in/out tiles + per-row f32 intermediates).
    resident_bytes: weight/bias bytes resident across tiles (counted 2x, since
                    BlockSpec inputs get two pipeline buffers even with a
                    constant index map).
    """
    avail = max(_VMEM_BUDGET - 2 * resident_bytes, 8 * row_bytes)
    tm = min(_TM_CAP, avail // max(row_bytes, 1))
    # Keep >= _MIN_TILES row tiles when M allows (v7x megacore), but never shrink
    # below 256 rows (amortize the ~0.35us per-grid-step overhead).
    tm = min(tm, max(256, _round_up(-(-m // _MIN_TILES), 8)))
    if m <= tm:
        return m                           # single full-extent tile (legal for any M)
    return max(8, (tm // 8) * 8)


def _mosaic_params(parallel=True):
    return pltpu.CompilerParams(
        dimension_semantics=("parallel",) if parallel else ("arbitrary",),
        vmem_limit_bytes=_VMEM_LIMIT)


# ---------------------------------------------------------------------------
# Kernel 1: SkipConnection(nn.Linear(H, H))  (feed_forward_hidden == 0 path)
#           out = x + x @ W + b      (W stored [H_in, H_out] = torch W^T)
# ---------------------------------------------------------------------------
def skip_linear_kernel(x_ref, w_ref, b_ref, o_ref):
    x = x_ref[...]
    acc = jnp.dot(x, w_ref[...], preferred_element_type=jnp.float32)
    acc = acc + b_ref[...] + x.astype(jnp.float32)
    o_ref[...] = acc.astype(o_ref.dtype)


def skip_connection_linear(x, w, b):
    """Fused out = x + x @ W + b for x:[B,S,H], w:[H,H] (=W^T), b:[H]."""
    B, S, H = x.shape
    M = B * S
    isz = jnp.dtype(x.dtype).itemsize

    Hp = H if H % 128 == 0 else _round_up(H, 128)
    x2 = x.reshape(M, H)
    if Hp != H:
        # Lane-dense pad on the contraction dim only; M is NOT padded (partial
        # last row tile is masked by Pallas).
        x2 = jnp.pad(x2, ((0, 0), (0, Hp - H)))
        w = jnp.pad(w, ((0, Hp - H), (0, Hp - H)))
        b = jnp.pad(b, ((0, Hp - H),))
    wp = w.astype(x.dtype)
    bp = b.astype(jnp.float32).reshape(1, Hp)

    resident = Hp * Hp * isz + Hp * 4               # W + bias (counted 2x in helper)
    row_bytes = 4 * Hp * isz + Hp * 4               # 2x in + 2x out tiles + f32 acc row
    TM = _choose_tm(M, row_bytes, resident)

    cost = pl.CostEstimate(
        flops=2 * M * H * H, transcendentals=0,
        bytes_accessed=2 * M * Hp * isz + Hp * Hp * isz + Hp * 4)

    out = pl.pallas_call(
        skip_linear_kernel,
        out_shape=jax.ShapeDtypeStruct((M, Hp), x.dtype),
        grid=(pl.cdiv(M, TM),),
        in_specs=[
            pl.BlockSpec((TM, Hp), lambda i: (i, 0)),   # x row tile (pipelined)
            pl.BlockSpec((Hp, Hp), lambda i: (0, 0)),   # W: resident across tiles
            pl.BlockSpec((1, Hp), lambda i: (0, 0)),    # bias: resident
        ],
        out_specs=pl.BlockSpec((TM, Hp), lambda i: (i, 0)),
        compiler_params=_mosaic_params(parallel=True),
        cost_estimate=cost,
    )(x2, wp, bp)

    if Hp != H:
        out = out[:, :H]
    return out.reshape(B, S, H)


# ---------------------------------------------------------------------------
# Kernel 2: SkipConnection(MultiHeadAttention)   out = h + MHA(h), self-attn.
# ---------------------------------------------------------------------------
def _make_mha_skip_kernel(n_heads, norm_factor):
    def kernel(x_ref, wq_ref, wk_ref, wv_ref, wo_ref, o_ref):
        x = x_ref[0]                                    # (S, Hp)
        acc = x.astype(jnp.float32)                     # residual
        for hd in range(n_heads):                       # static unroll over heads
            q = jnp.dot(x, wq_ref[hd], preferred_element_type=jnp.float32)
            k = jnp.dot(x, wk_ref[hd], preferred_element_type=jnp.float32)
            v = jnp.dot(x, wv_ref[hd], preferred_element_type=jnp.float32)
            compat = norm_factor * jax.lax.dot_general(
                q, k, (((1,), (1,)), ((), ())),
                preferred_element_type=jnp.float32)     # (S, S) = q @ k^T
            compat = compat - jnp.max(compat, axis=-1, keepdims=True)
            e = jnp.exp(compat)
            attn = e / jnp.sum(e, axis=-1, keepdims=True)
            head = jnp.dot(attn, v, preferred_element_type=jnp.float32)
            acc = acc + jnp.dot(head.astype(wo_ref.dtype), wo_ref[hd],
                                preferred_element_type=jnp.float32)
        o_ref[0] = acc.astype(o_ref.dtype)
    return kernel


def mha_skip(h, wq, wk, wv, wo):
    """h:[B,S,Hp]; wq/wk/wv:[n_heads,Hp,kd]; wo:[n_heads,vd,Hp]."""
    B, S, Hp = h.shape
    n_heads, _, kd = wq.shape
    kernel = _make_mha_skip_kernel(n_heads, 1.0 / math.sqrt(kd))
    # TODO(synk): one graph per grid step; long sequences should use a row-tiled
    # (flash-style) variant instead of whole-(S,S) attention in VMEM.
    return pl.pallas_call(
        kernel,
        out_shape=jax.ShapeDtypeStruct((B, S, Hp), h.dtype),
        grid=(B,),
        in_specs=[
            pl.BlockSpec((1, S, Hp), lambda bi: (bi, 0, 0)),
            pl.BlockSpec(wq.shape, lambda bi: (0, 0, 0)),
            pl.BlockSpec(wk.shape, lambda bi: (0, 0, 0)),
            pl.BlockSpec(wv.shape, lambda bi: (0, 0, 0)),
            pl.BlockSpec(wo.shape, lambda bi: (0, 0, 0)),
        ],
        out_specs=pl.BlockSpec((1, S, Hp), lambda bi: (bi, 0, 0)),
        compiler_params=_mosaic_params(parallel=True),
    )(h, wq, wk, wv, wo)


# ---------------------------------------------------------------------------
# Kernel 3: BatchNorm1d batch statistics (per-channel sum / sum-of-squares).
# ---------------------------------------------------------------------------
def _make_bn_stats_kernel(m_total, tm):
    def kernel(x_ref, sum_ref, sq_ref):
        i = pl.program_id(0)

        @pl.when(i == 0)
        def _():
            sum_ref[...] = jnp.zeros_like(sum_ref)
            sq_ref[...] = jnp.zeros_like(sq_ref)

        x = x_ref[...].astype(jnp.float32)
        if m_total % tm != 0:
            # Mask the undefined rows of the partial last tile.
            row = jax.lax.broadcasted_iota(jnp.int32, x.shape, 0) + i * tm
            x = jnp.where(row < m_total, x, 0.0)
        sum_ref[...] += jnp.sum(x, axis=0, keepdims=True)
        sq_ref[...] += jnp.sum(x * x, axis=0, keepdims=True)
    return kernel


def bn_scale_shift(x2, gamma, beta, eps=1e-5):
    """Training-mode BatchNorm folded to per-channel scale/shift: bn(x)=x*scale+shift."""
    M, Hp = x2.shape
    isz = jnp.dtype(x2.dtype).itemsize
    TM = _choose_tm(M, row_bytes=2 * Hp * isz + Hp * 4, resident_bytes=2 * Hp * 4)
    s, sq = pl.pallas_call(
        _make_bn_stats_kernel(M, TM),
        out_shape=(jax.ShapeDtypeStruct((1, Hp), jnp.float32),
                   jax.ShapeDtypeStruct((1, Hp), jnp.float32)),
        grid=(pl.cdiv(M, TM),),
        in_specs=[pl.BlockSpec((TM, Hp), lambda i: (i, 0))],
        out_specs=(pl.BlockSpec((1, Hp), lambda i: (0, 0)),
                   pl.BlockSpec((1, Hp), lambda i: (0, 0))),
        compiler_params=_mosaic_params(parallel=False),   # reduction axis
    )(x2)
    mean = s / M
    var = jnp.maximum(sq / M - mean * mean, 0.0)          # biased var (training BN)
    inv = jax.lax.rsqrt(var + eps)
    scale = gamma.reshape(1, Hp).astype(jnp.float32) * inv
    shift = beta.reshape(1, Hp).astype(jnp.float32) - mean * scale
    return scale, shift
    # TODO(synk): running-mean/var updates (training side effect) are not produced.


# ---------------------------------------------------------------------------
# Kernel 4: apply folded BatchNorm:  out = x * scale + shift
# ---------------------------------------------------------------------------
def bn_apply_kernel(x_ref, scale_ref, shift_ref, o_ref):
    x = x_ref[...].astype(jnp.float32)
    o_ref[...] = (x * scale_ref[...] + shift_ref[...]).astype(o_ref.dtype)


def bn_apply(x2, scale, shift):
    M, Hp = x2.shape
    isz = jnp.dtype(x2.dtype).itemsize
    TM = _choose_tm(M, row_bytes=4 * Hp * isz + Hp * 4, resident_bytes=4 * Hp * 4)
    return pl.pallas_call(
        bn_apply_kernel,
        out_shape=jax.ShapeDtypeStruct((M, Hp), x2.dtype),
        grid=(pl.cdiv(M, TM),),
        in_specs=[
            pl.BlockSpec((TM, Hp), lambda i: (i, 0)),
            pl.BlockSpec((1, Hp), lambda i: (0, 0)),
            pl.BlockSpec((1, Hp), lambda i: (0, 0)),
        ],
        out_specs=pl.BlockSpec((TM, Hp), lambda i: (i, 0)),
        compiler_params=_mosaic_params(parallel=True),
    )(x2, scale, shift)


# ---------------------------------------------------------------------------
# Kernel 5: BN1-apply + SkipConnection(FeedForward) fused:
#           xn = x*scale + shift ;  out = xn + relu(xn@W1 + b1) @ W2 + b2
# ---------------------------------------------------------------------------
def bn_ff_skip_kernel(x_ref, scale_ref, shift_ref, w1_ref, b1_ref, w2_ref, b2_ref, o_ref):
    xn = x_ref[...].astype(jnp.float32) * scale_ref[...] + shift_ref[...]
    h = jnp.dot(xn.astype(w1_ref.dtype), w1_ref[...],
                preferred_element_type=jnp.float32) + b1_ref[...]
    h = jnp.maximum(h, 0.0)
    acc = jnp.dot(h.astype(w2_ref.dtype), w2_ref[...],
                  preferred_element_type=jnp.float32) + b2_ref[...]
    o_ref[...] = (xn + acc).astype(o_ref.dtype)


def bn_ff_skip(x2, scale, shift, w1, b1, w2, b2):
    M, Hp = x2.shape
    F = w1.shape[1]
    isz = jnp.dtype(x2.dtype).itemsize
    wsz = jnp.dtype(w1.dtype).itemsize
    resident = (Hp * F + F + F * Hp + Hp) * wsz + 4 * Hp * 4
    row_bytes = 4 * Hp * isz + (2 * Hp + F) * 4       # in/out tiles + f32 xn/acc/h rows
    TM = _choose_tm(M, row_bytes, resident)
    cost = pl.CostEstimate(flops=4 * M * Hp * F, transcendentals=0,
                           bytes_accessed=2 * M * Hp * isz + resident)
    return pl.pallas_call(
        bn_ff_skip_kernel,
        out_shape=jax.ShapeDtypeStruct((M, Hp), x2.dtype),
        grid=(pl.cdiv(M, TM),),
        in_specs=[
            pl.BlockSpec((TM, Hp), lambda i: (i, 0)),
            pl.BlockSpec((1, Hp), lambda i: (0, 0)),
            pl.BlockSpec((1, Hp), lambda i: (0, 0)),
            pl.BlockSpec((Hp, F), lambda i: (0, 0)),
            pl.BlockSpec((1, F), lambda i: (0, 0)),
            pl.BlockSpec((F, Hp), lambda i: (0, 0)),
            pl.BlockSpec((1, Hp), lambda i: (0, 0)),
        ],
        out_specs=pl.BlockSpec((TM, Hp), lambda i: (i, 0)),
        compiler_params=_mosaic_params(parallel=True),
        cost_estimate=cost,
    )(x2, scale, shift, w1, b1.reshape(1, F).astype(jnp.float32),
      w2, b2.reshape(1, Hp).astype(jnp.float32))


# ---------------------------------------------------------------------------
# Full GraphAttentionEncoder forward (Pallas path)
# ---------------------------------------------------------------------------
def graph_attention_encoder_fwd(x, layers):
    """x: [B, S, H].  layers: per-layer dicts with H axes pre-padded to Hp.

    Returns (h, h.mean(axis=1)) like GraphAttentionEncoder.forward.
    """
    # TODO(synk): init_embed (nn.Linear(node_dim, embed_dim)) is not included;
    # this covers the node_dim=None instantiation (inputs already embedded).
    B, S, H = x.shape
    Hp = layers[0]["bn1_g"].shape[0]
    h = jnp.pad(x, ((0, 0), (0, 0), (0, Hp - H))) if Hp != H else x
    M = B * S
    for p in layers:
        y = mha_skip(h, p["wq"], p["wk"], p["wv"], p["wo"])            # h + MHA(h)
        y2 = y.reshape(M, Hp)
        sc1, sh1 = bn_scale_shift(y2, p["bn1_g"], p["bn1_b"])          # BN1 stats
        z = bn_ff_skip(y2, sc1, sh1, p["w1"], p["b1"], p["w2"], p["b2"])  # BN1 + FF skip
        sc2, sh2 = bn_scale_shift(z, p["bn2_g"], p["bn2_b"])           # BN2 stats
        h = bn_apply(z, sc2, sh2).reshape(B, S, Hp)                    # BN2 apply
    h = h[..., :H] if Hp != H else h
    # TODO(synk): final mean-pool over nodes (h.mean(dim=1)) is left to XLA.
    return h, h.mean(axis=1)


# ---------------------------------------------------------------------------
# Pure-JAX references
# ---------------------------------------------------------------------------
def _mha_ref(h, wq, wk, wv, wo):
    kd = wq.shape[-1]
    norm = 1.0 / math.sqrt(kd)
    q = jnp.einsum("bsh,nhk->nbsk", h, wq)
    k = jnp.einsum("bsh,nhk->nbsk", h, wk)
    v = jnp.einsum("bsh,nhv->nbsv", h, wv)
    compat = norm * jnp.einsum("nbqk,nbsk->nbqs", q, k)
    attn = jax.nn.softmax(compat, axis=-1)
    heads = jnp.einsum("nbqs,nbsv->nbqv", attn, v)
    return jnp.einsum("nbqv,nvh->bqh", heads, wo)


def _bn_ref(h, gamma, beta, eps=1e-5):
    H = h.shape[-1]
    x2 = h.reshape(-1, H)
    mean = x2.mean(axis=0)
    var = jnp.mean((x2 - mean) ** 2, axis=0)
    xn = (x2 - mean) * jax.lax.rsqrt(var + eps)
    return (xn * gamma + beta).reshape(h.shape)


def encoder_reference(x, layers):
    h = x
    for p in layers:
        h = _bn_ref(h + _mha_ref(h, p["wq"], p["wk"], p["wv"], p["wo"]),
                    p["bn1_g"], p["bn1_b"])
        x2 = h.reshape(-1, h.shape[-1])
        ff = jnp.maximum(x2 @ p["w1"] + p["b1"], 0.0) @ p["w2"] + p["b2"]
        h = _bn_ref(h + ff.reshape(h.shape), p["bn2_g"], p["bn2_b"])
    return h, h.mean(axis=1)


if __name__ == "__main__":
    key = jax.random.PRNGKey(0)

    # ---- 1) Reviewed fused skip-linear kernel (feed_forward_hidden == 0) ----
    def skip_ref(x, w, b):
        return x + jnp.einsum("bsh,hk->bsk", x, w) + b

    fn = jax.jit(skip_connection_linear)
    # small spec shape; H-pad path; multi-tile grid with a partial last row tile.
    for idx, (batch, seq, hidden) in enumerate([(2, 8, 32), (3, 13, 96), (8, 201, 128)]):
        kx, kw, kb = jax.random.split(jax.random.fold_in(key, idx), 3)
        bound = 1.0 / math.sqrt(hidden)
        x = jax.random.normal(kx, (batch, seq, hidden), dtype=jnp.float32)
        w = jax.random.uniform(kw, (hidden, hidden), minval=-bound, maxval=bound,
                               dtype=jnp.float32)
        b = jax.random.uniform(kb, (hidden,), minval=-bound, maxval=bound,
                               dtype=jnp.float32)
        out = jax.block_until_ready(fn(x, w, b))
        assert out.shape == (batch, seq, hidden)
        assert jnp.allclose(out, skip_ref(x, w, b), atol=1e-4, rtol=1e-4), \
            f"skip_linear mismatch at {(batch, seq, hidden)}"

    # bf16 I/O variant (halves HBM traffic; f32 accumulation inside the kernel).
    kx, kw, kb = jax.random.split(jax.random.fold_in(key, 100), 3)
    bound = 1.0 / math.sqrt(128.0)
    x = jax.random.normal(kx, (4, 64, 128), dtype=jnp.float32)
    w = jax.random.uniform(kw, (128, 128), minval=-bound, maxval=bound, dtype=jnp.float32)
    b = jax.random.uniform(kb, (128,), minval=-bound, maxval=bound, dtype=jnp.float32)
    xb, wb = x.astype(jnp.bfloat16), w.astype(jnp.bfloat16)
    out = jax.block_until_ready(fn(xb, wb, b))
    ref = skip_ref(xb.astype(jnp.float32), wb.astype(jnp.float32), b)
    assert out.dtype == jnp.bfloat16
    assert jnp.allclose(out.astype(jnp.float32), ref, atol=5e-2, rtol=5e-2), \
        "skip_linear bf16 mismatch"

    # ---- 2) Full GraphAttentionEncoder forward ----
    B, S, H = 2, 10, 32                 # batch, graph_size, embed_dim
    n_heads, n_layers, ffh = 4, 2, 64   # feed_forward_hidden > 0 path
    kd = H // n_heads

    def uniform(k, shape, bound):
        return jax.random.uniform(k, shape, minval=-bound, maxval=bound,
                                  dtype=jnp.float32)

    layers = []
    for li in range(n_layers):
        ks = jax.random.split(jax.random.fold_in(key, 1000 + li), 8)
        layers.append(dict(
            wq=uniform(ks[0], (n_heads, H, kd), 1.0 / math.sqrt(kd)),
            wk=uniform(ks[1], (n_heads, H, kd), 1.0 / math.sqrt(kd)),
            wv=uniform(ks[2], (n_heads, H, kd), 1.0 / math.sqrt(kd)),
            wo=uniform(ks[3], (n_heads, kd, H), 1.0 / math.sqrt(H)),
            bn1_g=jnp.ones((H,), jnp.float32), bn1_b=jnp.zeros((H,), jnp.float32),
            w1=uniform(ks[4], (H, ffh), 1.0 / math.sqrt(H)),
            b1=uniform(ks[5], (ffh,), 1.0 / math.sqrt(H)),
            w2=uniform(ks[6], (ffh, H), 1.0 / math.sqrt(ffh)),
            b2=uniform(ks[7], (H,), 1.0 / math.sqrt(ffh)),
            bn2_g=jnp.ones((H,), jnp.float32), bn2_b=jnp.zeros((H,), jnp.float32),
        ))

    # Pre-pad weight H axes once, outside the jitted hot path.  Zero padding keeps
    # the padded channels exactly zero through every layer (gamma/beta pad with 0).
    Hp = H if H % 128 == 0 else _round_up(H, 128)

    def pad_h(a, axes):
        if Hp == H:
            return a
        pads = [(0, 0)] * a.ndim
        for ax in axes:
            pads[ax] = (0, Hp - H)
        return jnp.pad(a, pads)

    layers_pad = [dict(
        wq=pad_h(p["wq"], [1]), wk=pad_h(p["wk"], [1]), wv=pad_h(p["wv"], [1]),
        wo=pad_h(p["wo"], [2]),
        bn1_g=pad_h(p["bn1_g"], [0]), bn1_b=pad_h(p["bn1_b"], [0]),
        w1=pad_h(p["w1"], [0]), b1=p["b1"],
        w2=pad_h(p["w2"], [1]), b2=pad_h(p["b2"], [0]),
        bn2_g=pad_h(p["bn2_g"], [0]), bn2_b=pad_h(p["bn2_b"], [0]),
    ) for p in layers]

    x = jax.random.normal(jax.random.fold_in(key, 2000), (B, S, H), dtype=jnp.float32)

    enc = jax.jit(graph_attention_encoder_fwd)
    h_out, h_mean = jax.block_until_ready(enc(x, layers_pad))
    h_ref, m_ref = encoder_reference(x, layers)

    assert h_out.shape == (B, S, H) and h_mean.shape == (B, H)
    assert jnp.allclose(h_out, h_ref, atol=2e-3, rtol=2e-3), "encoder h mismatch"
    assert jnp.allclose(h_mean, m_ref, atol=2e-3, rtol=2e-3), "encoder mean mismatch"

    print("KERNEL_OK")
</pallas_src>

<mosaic_0001>
module attributes {stable_mosaic.version = 11 : i64} {
  func.func @skip_linear_kernel(%arg0: i32, %arg1: memref<16x128xf32, #tpu.memory_space<vmem>>, %arg2: memref<128x128xf32, #tpu.memory_space<vmem>>, %arg3: memref<1x128xf32, #tpu.memory_space<vmem>>, %arg4: memref<16x128xf32, #tpu.memory_space<vmem>>) attributes {dimension_semantics = [#tpu.dimension_semantics<parallel>], iteration_bounds = array<i64: 1>, scalar_prefetch = 0 : i64, scratch_operands = 0 : i64, tpu.core_type = #tpu.core_type<tc>, window_params = [{transform_indices = @transform_0, window_bounds = array<i64: 16, 128>}, {pipeline_mode = #tpu.pipeline_mode<synchronous>, transform_indices = @transform_1, window_bounds = array<i64: 128, 128>}, {pipeline_mode = #tpu.pipeline_mode<synchronous>, transform_indices = @transform_2, window_bounds = array<i64: 1, 128>}, {transform_indices = @transform_3, window_bounds = array<i64: 16, 128>}]} {
    %c0 = arith.constant 0 : index
    %c0_0 = arith.constant 0 : index
    %0 = vector.load %arg1[%c0, %c0_0] : memref<16x128xf32, #tpu.memory_space<vmem>>, vector<16x128xf32>
    %c0_1 = arith.constant 0 : index
    %c0_2 = arith.constant 0 : index
    %1 = vector.load %arg2[%c0_1, %c0_2] : memref<128x128xf32, #tpu.memory_space<vmem>>, vector<128x128xf32>
    %cst = arith.constant dense<0.000000e+00> : vector<16x128xf32>
    %2 = tpu.matmul %0, %1, %cst {dimension_numbers = #tpu.dot_dimension_numbers<[1], [0], [0], [1], [0, 0, 1, 1], [], []>, precision = #tpu.contract_precision<fp32>} : vector<16x128xf32>, vector<128x128xf32>, vector<16x128xf32> -> vector<16x128xf32>
    %c0_3 = arith.constant 0 : index
    %c0_4 = arith.constant 0 : index
    %3 = vector.load %arg3[%c0_3, %c0_4] : memref<1x128xf32, #tpu.memory_space<vmem>>, vector<1x128xf32>
    %4 = vector.broadcast %3 : vector<1x128xf32> to vector<16x128xf32>
    %5 = arith.addf %2, %4 : vector<16x128xf32>
    %6 = arith.addf %5, %0 : vector<16x128xf32>
    %c0_5 = arith.constant 0 : index
    %c0_6 = arith.constant 0 : index
    %7 = vector.load %arg4[%c0_5, %c0_6] : memref<16x128xf32, #tpu.memory_space<vmem>>, vector<16x128xf32>
    tpu.vector_store %arg4[%c0_5, %c0_6], %6 {strides = array<i32>} : memref<16x128xf32, #tpu.memory_space<vmem>>, vector<16x128xf32>,
    return
  }
  func.func @transform_0(%arg0: i32) -> (i32, i32) {
    %c0_i32 = arith.constant 0 : i32
    %c0_i32_0 = arith.constant 0 : i32
    return %arg0, %c0_i32 : i32, i32
  }
  func.func @transform_1(%arg0: i32) -> (i32, i32) {
    %c0_i32 = arith.constant 0 : i32
    %c0_i32_0 = arith.constant 0 : i32
    %c0_i32_1 = arith.constant 0 : i32
    return %c0_i32, %c0_i32_0 : i32, i32
  }
  func.func @transform_2(%arg0: i32) -> (i32, i32) {
    %c0_i32 = arith.constant 0 : i32
    %c0_i32_0 = arith.constant 0 : i32
    %c0_i32_1 = arith.constant 0 : i32
    return %c0_i32, %c0_i32_0 : i32, i32
  }
  func.func @transform_3(%arg0: i32) -> (i32, i32) {
    %c0_i32 = arith.constant 0 : i32
    %c0_i32_0 = arith.constant 0 : i32
    return %arg0, %c0_i32 : i32, i32
  }
}

</mosaic_0001>

<llo_original>
// kernel: skip_connection_linear.1
$region0: #{skip_connection_linear.1}
  #allocation0 [shape = 'u32[]', space=smem, size = 0x4, offset = 0x4, fixed_abs, tag = 'smem constant byte address 0x4 - core index']
  #allocation1 [shape = 'u32[72,128]{1,0:T(1,128)}', space=vmem, size = 0x9000, scoped, tag = 'internal scratch']
  %s0 = inlined_call_operand.vmem [shape: f32[16,128], index: 0, kind: input, shape index: {}]
  %s1 = inlined_call_operand.vmem [shape: f32[128,128], index: 1, kind: input, shape index: {}]
  %s2 = inlined_call_operand.vmem [shape: f32[1,128], index: 2, kind: input, shape index: {}]
  %s3 = inlined_call_operand.vmem [shape: f32[16,128], index: 3, kind: output, shape index: {}]
  %s4 = sld [smem:[#allocation0]]
  $region22: #{skip_connection_linear.1} parent=0
    _
  %s6 = ssub.s32 1, %s4
  %s7 = scalar_select 0, %s6, %s4
  // Predicated region
  $region2: #{skip_connection_linear.1} parent=0 // pred_check
    _
  $region3: #{skip_connection_linear.1} parent=0 // pred_check_branch
    %9 = sbr.rel (0) target = $region5
  $region4: #{skip_connection_linear.1} parent=0 // pred_region
    _
  $region5: #{skip_connection_linear.1} parent=0 // pred_fallthru
    _
  // Predicated region
  $region6: #{skip_connection_linear.1} parent=0 // pred_check
    _
  $region7: #{skip_connection_linear.1} parent=0 // pred_check_branch
    %11 = sbr.rel (0) target = $region9
  $region8: #{skip_connection_linear.1} parent=0 // pred_region
    _
  $region9: #{skip_connection_linear.1} parent=0 // pred_fallthru
    _
  // Predicated region
  $region10: #{skip_connection_linear.1} parent=0 // pred_check
    _
  $region11: #{skip_connection_linear.1} parent=0 // pred_check_branch
    %13 = sbr.rel (0) target = $region13
  $region12: #{skip_connection_linear.1} parent=0 // pred_region
    _
  $region13: #{skip_connection_linear.1} parent=0 // pred_fallthru
    _
  %v14 = vld [vmem:[%s0] sm:$0xff]
  %v15 = vld [vmem:[%s0 + $0x8] sm:$0xff]
  %v16 = vld [vmem:[%s1] sm:$0xff]
  %v17 = vld [vmem:[%s1 + $0x8] sm:$0xff]
  %v18 = vld [vmem:[%s1 + $0x10] sm:$0xff]
  %v19 = vld [vmem:[%s1 + $0x18] sm:$0xff]
  %v20 = vld [vmem:[%s1 + $0x20] sm:$0xff]
  %v21 = vld [vmem:[%s1 + $0x28] sm:$0xff]
  %v22 = vld [vmem:[%s1 + $0x30] sm:$0xff]
  %v23 = vld [vmem:[%s1 + $0x38] sm:$0xff]
  %v24 = vld [vmem:[%s1 + $0x40] sm:$0xff]
  %v25 = vld [vmem:[%s1 + $0x48] sm:$0xff]
  %v26 = vld [vmem:[%s1 + $0x50] sm:$0xff]
  %v27 = vld [vmem:[%s1 + $0x58] sm:$0xff]
  %v28 = vld [vmem:[%s1 + $0x60] sm:$0xff]
  %v29 = vld [vmem:[%s1 + $0x68] sm:$0xff]
  %v30 = vld [vmem:[%s1 + $0x70] sm:$0xff]
  %v31 = vld [vmem:[%s1 + $0x78] sm:$0xff]
  %v32 = vld [vmem:[%s2] sm:$0x1]
  %v34 = vperm.slane %v32, 0
  %v36 = vand.u32 %v31, 4294901760
  %37 = vmatpush.msra.mxu0 %v36
  %v38 = vand.u32 %v30, 4294901760
  %39 = vmatpush.msra.mxu0 %v38
  %v40 = vand.u32 %v29, 4294901760
  %41 = vmatpush.msra.mxu0 %v40
  %v42 = vand.u32 %v28, 4294901760
  %43 = vmatpush.msra.mxu0 %v42
  %v44 = vand.u32 %v27, 4294901760
  %45 = vmatpush.msra.mxu0 %v44
  %v46 = vand.u32 %v26, 4294901760
  %47 = vmatpush.msra.mxu0 %v46
  %v48 = vand.u32 %v25, 4294901760
  %49 = vmatpush.msra.mxu0 %v48
  %v50 = vand.u32 %v24, 4294901760
  %51 = vmatpush.msra.mxu0 %v50
  %v52 = vand.u32 %v23, 4294901760
  %53 = vmatpush.msra.mxu0 %v52
  %v54 = vand.u32 %v22, 4294901760
  %55 = vmatpush.msra.mxu0 %v54
  %v56 = vand.u32 %v21, 4294901760
  %57 = vmatpush.msra.mxu0 %v56
  %v58 = vand.u32 %v20, 4294901760
  %59 = vmatpush.msra.mxu0 %v58
  %v60 = vand.u32 %v19, 4294901760
  %61 = vmatpush.msra.mxu0 %v60
  %v62 = vand.u32 %v18, 4294901760
  %63 = vmatpush.msra.mxu0 %v62
  %v64 = vand.u32 %v17, 4294901760
  %65 = vmatpush.msra.mxu0 %v64
  %v66 = vand.u32 %v16, 4294901760
  %67 = vmatpush.msra.mxu0 %v66
  %v68 = vand.u32 %v14, 4294901760
  %v69 = vsub.f32 %v14, %v68
  %v70 = vand.u32 %v69, 4294901760
  %v71 = vsub.f32 %v69, %v70
  %v72 = vand.u32 %v71, 4294901760
  %73 = vmatmul.f32.gmra.mxu0 %v72
  %v74 = vpop.f32.mrf.mxu0
  %v75 = vadd.f32 %v34, %v74
  %v76 = vand.u32 %v15, 4294901760
  %v77 = vsub.f32 %v15, %v76
  %v78 = vand.u32 %v77, 4294901760
  %v79 = vsub.f32 %v77, %v78
  %v80 = vand.u32 %v79, 4294901760
  %81 = vmatmul.f32.gmra.mxu0 %v80
  %v82 = vpop.f32.mrf.mxu0
  %v83 = vadd.f32 %v34, %v82
  %84 = vdwg.mxu0
  %v85 = vand.u32 %v31, 4294901760
  %v86 = vsub.f32 %v31, %v85
  %v87 = vand.u32 %v86, 4294901760
  %v88 = vsub.f32 %v86, %v87
  %v89 = vand.u32 %v88, 4294901760
  %90 = vmatpush.msra.mxu0 %v89
  %v91 = vand.u32 %v30, 4294901760
  %v92 = vsub.f32 %v30, %v91
  %v93 = vand.u32 %v92, 4294901760
  %v94 = vsub.f32 %v92, %v93
  %v95 = vand.u32 %v94, 4294901760
  %96 = vmatpush.msra.mxu0 %v95
  %v97 = vand.u32 %v29, 4294901760
  %v98 = vsub.f32 %v29, %v97
  %v99 = vand.u32 %v98, 4294901760
  %v100 = vsub.f32 %v98, %v99
  %v101 = vand.u32 %v100, 4294901760
  %102 = vmatpush.msra.mxu0 %v101
  %v103 = vand.u32 %v28, 4294901760
  %v104 = vsub.f32 %v28, %v103
  %v105 = vand.u32 %v104, 4294901760
  %v106 = vsub.f32 %v104, %v105
  %v107 = vand.u32 %v106, 4294901760
  %108 = vmatpush.msra.mxu0 %v107
  %v109 = vand.u32 %v27, 4294901760
  %v110 = vsub.f32 %v27, %v109
  %v111 = vand.u32 %v110, 4294901760
  %v112 = vsub.f32 %v110, %v111
  %v113 = vand.u32 %v112, 4294901760
  %114 = vmatpush.msra.mxu0 %v113
  %v115 = vand.u32 %v26, 4294901760
  %v116 = vsub.f32 %v26, %v115
  %v117 = vand.u32 %v116, 4294901760
  %v118 = vsub.f32 %v116, %v117
  %v119 = vand.u32 %v118, 4294901760
  %120 = vmatpush.msra.mxu0 %v119
  %v121 = vand.u32 %v25, 4294901760
  %v122 = vsub.f32 %v25, %v121
  %v123 = vand.u32 %v122, 4294901760
  %v124 = vsub.f32 %v122, %v123
  %v125 = vand.u32 %v124, 4294901760
  %126 = vmatpush.msra.mxu0 %v125
  %v127 = vand.u32 %v24, 4294901760
  %v128 = vsub.f32 %v24, %v127
  %v129 = vand.u32 %v128, 4294901760
  %v130 = vsub.f32 %v128, %v129
  %v131 = vand.u32 %v130, 4294901760
  %132 = vmatpush.msra.mxu0 %v131
  %v133 = vand.u32 %v23, 4294901760
  %v134 = vsub.f32 %v23, %v133
  %v135 = vand.u32 %v134, 4294901760
  %v136 = vsub.f32 %v134, %v135
  %v137 = vand.u32 %v136, 4294901760
  %138 = vmatpush.msra.mxu0 %v137
  %v139 = vand.u32 %v22, 4294901760
  %v140 = vsub.f32 %v22, %v139
  %v141 = vand.u32 %v140, 4294901760
  %v142 = vsub.f32 %v140, %v141
  %v143 = vand.u32 %v142, 4294901760
  %144 = vmatpush.msra.mxu0 %v143
  %v145 = vand.u32 %v21, 4294901760
  %v146 = vsub.f32 %v21, %v145
  %v147 = vand.u32 %v146, 4294901760
  %v148 = vsub.f32 %v146, %v147
  %v149 = vand.u32 %v148, 4294901760
  %150 = vmatpush.msra.mxu0 %v149
  %v151 = vand.u32 %v20, 4294901760
  %v152 = vsub.f32 %v20, %v151
  %v153 = vand.u32 %v152, 4294901760
  %v154 = vsub.f32 %v152, %v153
  %v155 = vand.u32 %v154, 4294901760
  %156 = vmatpush.msra.mxu0 %v155
  %v157 = vand.u32 %v19, 4294901760
  %v158 = vsub.f32 %v19, %v157
  %v159 = vand.u32 %v158, 4294901760
  %v160 = vsub.f32 %v158, %v159
  %v161 = vand.u32 %v160, 4294901760
  %162 = vmatpush.msra.mxu0 %v161
  %v163 = vand.u32 %v18, 4294901760
  %v164 = vsub.f32 %v18, %v163
  %v165 = vand.u32 %v164, 4294901760
  %v166 = vsub.f32 %v164, %v165
  %v167 = vand.u32 %v166, 4294901760
  %168 = vmatpush.msra.mxu0 %v167
  %v169 = vand.u32 %v17, 4294901760
  %v170 = vsub.f32 %v17, %v169
  %v171 = vand.u32 %v170, 4294901760
  %v172 = vsub.f32 %v170, %v171
  %v173 = vand.u32 %v172, 4294901760
  %174 = vmatpush.msra.mxu0 %v173
  %v175 = vand.u32 %v16, 4294901760
  %v176 = vsub.f32 %v16, %v175
  %v177 = vand.u32 %v176, 4294901760
  %v178 = vsub.f32 %v176, %v177
  %v179 = vand.u32 %v178, 4294901760
  %180 = vmatpush.msra.mxu0 %v179
  %v181 = vand.u32 %v14, 4294901760
  %182 = vmatmul.f32.gmra.mxu0 %v181
  %v183 = vpop.f32.mrf.mxu0
  %v184 = vadd.f32 %v75, %v183
  %v185 = vand.u32 %v15, 4294901760
  %186 = vmatmul.f32.gmra.mxu0 %v185
  %v187 = vpop.f32.mrf.mxu0
  %v188 = vadd.f32 %v83, %v187
  %189 = vdwg.mxu0
  %v190 = vand.u32 %v31, 4294901760
  %v191 = vsub.f32 %v31, %v190
  %192 = vmatpush.msra.mxu0 %v191
  %v193 = vand.u32 %v30, 4294901760
  %v194 = vsub.f32 %v30, %v193
  %195 = vmatpush.msra.mxu0 %v194
  %v196 = vand.u32 %v29, 4294901760
  %v197 = vsub.f32 %v29, %v196
  %198 = vmatpush.msra.mxu0 %v197
  %v199 = vand.u32 %v28, 4294901760
  %v200 = vsub.f32 %v28, %v199
  %201 = vmatpush.msra.mxu0 %v200
  %v202 = vand.u32 %v27, 4294901760
  %v203 = vsub.f32 %v27, %v202
  %204 = vmatpush.msra.mxu0 %v203
  %v205 = vand.u32 %v26, 4294901760
  %v206 = vsub.f32 %v26, %v205
  %207 = vmatpush.msra.mxu0 %v206
  %v208 = vand.u32 %v25, 4294901760
  %v209 = vsub.f32 %v25, %v208
  %210 = vmatpush.msra.mxu0 %v209
  %v211 = vand.u32 %v24, 4294901760
  %v212 = vsub.f32 %v24, %v211
  %213 = vmatpush.msra.mxu0 %v212
  %v214 = vand.u32 %v23, 4294901760
  %v215 = vsub.f32 %v23, %v214
  %216 = vmatpush.msra.mxu0 %v215
  %v217 = vand.u32 %v22, 4294901760
  %v218 = vsub.f32 %v22, %v217
  %219 = vmatpush.msra.mxu0 %v218
  %v220 = vand.u32 %v21, 4294901760
  %v221 = vsub.f32 %v21, %v220
  %222 = vmatpush.msra.mxu0 %v221
  %v223 = vand.u32 %v20, 4294901760
  %v224 = vsub.f32 %v20, %v223
  %225 = vmatpush.msra.mxu0 %v224
  %v226 = vand.u32 %v19, 4294901760
  %v227 = vsub.f32 %v19, %v226
  %228 = vmatpush.msra.mxu0 %v227
  %v229 = vand.u32 %v18, 4294901760
  %v230 = vsub.f32 %v18, %v229
  %231 = vmatpush.msra.mxu0 %v230
  %v232 = vand.u32 %v17, 4294901760
  %v233 = vsub.f32 %v17, %v232
  %234 = vmatpush.msra.mxu0 %v233
  %v235 = vand.u32 %v16, 4294901760
  %v236 = vsub.f32 %v16, %v235
  %237 = vmatpush.msra.mxu0 %v236
  %v238 = vand.u32 %v14, 4294901760
  %v239 = vsub.f32 %v14, %v238
  %240 = vmatmul.f32.gmra.mxu0 %v239
  %v241 = vpop.f32.mrf.mxu0
  %v242 = vadd.f32 %v184, %v241
  %v243 = vand.u32 %v15, 4294901760
  %v244 = vsub.f32 %v15, %v243
  %245 = vmatmul.f32.gmra.mxu0 %v244
  %v246 = vpop.f32.mrf.mxu0
  %v247 = vadd.f32 %v188, %v246
  %248 = vdwg.mxu0
  %v249 = vand.u32 %v31, 4294901760
  %250 = vmatpush.msra.mxu0 %v249
  %v251 = vand.u32 %v30, 4294901760
  %252 = vmatpush.msra.mxu0 %v251
  %v253 = vand.u32 %v29, 4294901760
  %254 = vmatpush.msra.mxu0 %v253
  %v255 = vand.u32 %v28, 4294901760
  %256 = vmatpush.msra.mxu0 %v255
  %v257 = vand.u32 %v27, 4294901760
  %258 = vmatpush.msra.mxu0 %v257
  %v259 = vand.u32 %v26, 4294901760
  %260 = vmatpush.msra.mxu0 %v259
  %v261 = vand.u32 %v25, 4294901760
  %262 = vmatpush.msra.mxu0 %v261
  %v263 = vand.u32 %v24, 4294901760
  %264 = vmatpush.msra.mxu0 %v263
  %v265 = vand.u32 %v23, 4294901760
  %266 = vmatpush.msra.mxu0 %v265
  %v267 = vand.u32 %v22, 4294901760
  %268 = vmatpush.msra.mxu0 %v267
  %v269 = vand.u32 %v21, 4294901760
  %270 = vmatpush.msra.mxu0 %v269
  %v271 = vand.u32 %v20, 4294901760
  %272 = vmatpush.msra.mxu0 %v271
  %v273 = vand.u32 %v19, 4294901760
  %274 = vmatpush.msra.mxu0 %v273
  %v275 = vand.u32 %v18, 4294901760
  %276 = vmatpush.msra.mxu0 %v275
  %v277 = vand.u32 %v17, 4294901760
  %278 = vmatpush.msra.mxu0 %v277
  %v279 = vand.u32 %v16, 4294901760
  %280 = vmatpush.msra.mxu0 %v279
  %v281 = vand.u32 %v14, 4294901760
  %v282 = vsub.f32 %v14, %v281
  %v283 = vand.u32 %v282, 4294901760
  %284 = vmatmul.f32.gmra.mxu0 %v283
  %v285 = vpop.f32.mrf.mxu0
  %v286 = vadd.f32 %v242, %v285
  %v287 = vand.u32 %v15, 4294901760
  %v288 = vsub.f32 %v15, %v287
  %v289 = vand.u32 %v288, 4294901760
  %290 = vmatmul.f32.gmra.mxu0 %v289
  %v291 = vpop.f32.mrf.mxu0
  %v292 = vadd.f32 %v247, %v291
  %293 = vdwg.mxu0
  %v294 = vand.u32 %v31, 4294901760
  %v295 = vsub.f32 %v31, %v294
  %v296 = vand.u32 %v295, 4294901760
  %297 = vmatpush.msra.mxu0 %v296
  %v298 = vand.u32 %v30, 4294901760
  %v299 = vsub.f32 %v30, %v298
  %v300 = vand.u32 %v299, 4294901760
  %301 = vmatpush.msra.mxu0 %v300
  %v302 = vand.u32 %v29, 4294901760
  %v303 = vsub.f32 %v29, %v302
  %v304 = vand.u32 %v303, 4294901760
  %305 = vmatpush.msra.mxu0 %v304
  %v306 = vand.u32 %v28, 4294901760
  %v307 = vsub.f32 %v28, %v306
  %v308 = vand.u32 %v307, 4294901760
  %309 = vmatpush.msra.mxu0 %v308
  %v310 = vand.u32 %v27, 4294901760
  %v311 = vsub.f32 %v27, %v310
  %v312 = vand.u32 %v311, 4294901760
  %313 = vmatpush.msra.mxu0 %v312
  %v314 = vand.u32 %v26, 4294901760
  %v315 = vsub.f32 %v26, %v314
  %v316 = vand.u32 %v315, 4294901760
  %317 = vmatpush.msra.mxu0 %v316
  %v318 = vand.u32 %v25, 4294901760
  %v319 = vsub.f32 %v25, %v318
  %v320 = vand.u32 %v319, 4294901760
  %321 = vmatpush.msra.mxu0 %v320
  %v322 = vand.u32 %v24, 4294901760
  %v323 = vsub.f32 %v24, %v322
  %v324 = vand.u32 %v323, 4294901760
  %325 = vmatpush.msra.mxu0 %v324
  %v326 = vand.u32 %v23, 4294901760
  %v327 = vsub.f32 %v23, %v326
  %v328 = vand.u32 %v327, 4294901760
  %329 = vmatpush.msra.mxu0 %v328
  %v330 = vand.u32 %v22, 4294901760
  %v331 = vsub.f32 %v22, %v330
  %v332 = vand.u32 %v331, 4294901760
  %333 = vmatpush.msra.mxu0 %v332
  %v334 = vand.u32 %v21, 4294901760
  %v335 = vsub.f32 %v21, %v334
  %v336 = vand.u32 %v335, 4294901760
  %337 = vmatpush.msra.mxu0 %v336
  %v338 = vand.u32 %v20, 4294901760
  %v339 = vsub.f32 %v20, %v338
  %v340 = vand.u32 %v339, 4294901760
  %341 = vmatpush.msra.mxu0 %v340
  %v342 = vand.u32 %v19, 4294901760
  %v343 = vsub.f32 %v19, %v342
  %v344 = vand.u32 %v343, 4294901760
  %345 = vmatpush.msra.mxu0 %v344
  %v346 = vand.u32 %v18, 4294901760
  %v347 = vsub.f32 %v18, %v346
  %v348 = vand.u32 %v347, 4294901760
  %349 = vmatpush.msra.mxu0 %v348
  %v350 = vand.u32 %v17, 4294901760
  %v351 = vsub.f32 %v17, %v350
  %v352 = vand.u32 %v351, 4294901760
  %353 = vmatpush.msra.mxu0 %v352
  %v354 = vand.u32 %v16, 4294901760
  %v355 = vsub.f32 %v16, %v354
  %v356 = vand.u32 %v355, 4294901760
  %357 = vmatpush.msra.mxu0 %v356
  %v358 = vand.u32 %v14, 4294901760
  %359 = vmatmul.f32.gmra.mxu0 %v358
  %v360 = vpop.f32.mrf.mxu0
  %v361 = vadd.f32 %v286, %v360
  %v362 = vand.u32 %v15, 4294901760
  %363 = vmatmul.f32.gmra.mxu0 %v362
  %v364 = vpop.f32.mrf.mxu0
  %v365 = vadd.f32 %v292, %v364
  %366 = vdwg.mxu0
  %v367 = vand.u32 %v31, 4294901760
  %368 = vmatpush.msra.mxu0 %v367
  %v369 = vand.u32 %v30, 4294901760
  %370 = vmatpush.msra.mxu0 %v369
  %v371 = vand.u32 %v29, 4294901760
  %372 = vmatpush.msra.mxu0 %v371
  %v373 = vand.u32 %v28, 4294901760
  %374 = vmatpush.msra.mxu0 %v373
  %v375 = vand.u32 %v27, 4294901760
  %376 = vmatpush.msra.mxu0 %v375
  %v377 = vand.u32 %v26, 4294901760
  %378 = vmatpush.msra.mxu0 %v377
  %v379 = vand.u32 %v25, 4294901760
  %380 = vmatpush.msra.mxu0 %v379
  %v381 = vand.u32 %v24, 4294901760
  %382 = vmatpush.msra.mxu0 %v381
  %v383 = vand.u32 %v23, 4294901760
  %384 = vmatpush.msra.mxu0 %v383
  %v385 = vand.u32 %v22, 4294901760
  %386 = vmatpush.msra.mxu0 %v385
  %v387 = vand.u32 %v21, 4294901760
  %388 = vmatpush.msra.mxu0 %v387
  %v389 = vand.u32 %v20, 4294901760
  %390 = vmatpush.msra.mxu0 %v389
  %v391 = vand.u32 %v19, 4294901760
  %392 = vmatpush.msra.mxu0 %v391
  %v393 = vand.u32 %v18, 4294901760
  %394 = vmatpush.msra.mxu0 %v393
  %v395 = vand.u32 %v17, 4294901760
  %396 = vmatpush.msra.mxu0 %v395
  %v397 = vand.u32 %v16, 4294901760
  %398 = vmatpush.msra.mxu0 %v397
  %v399 = vand.u32 %v14, 4294901760
  %400 = vmatmul.f32.gmra.mxu0 %v399
  %v401 = vpop.f32.mrf.mxu0
  %v402 = vadd.f32 %v361, %v401
  %v403 = vand.u32 %v15, 4294901760
  %404 = vmatmul.f32.gmra.mxu0 %v403
  %v405 = vpop.f32.mrf.mxu0
  %v406 = vadd.f32 %v365, %v405
  %407 = vdwg.mxu0
  %v408 = vadd.f32 %v402, %v14
  %v409 = vadd.f32 %v406, %v15
  %410 = vst [vmem:[%s3] sm:$0xff] %v408
  %411 = vst [vmem:[%s3 + $0x8] sm:$0xff] %v409
  // Predicated region
  $region14: #{skip_connection_linear.1} parent=0 // pred_check
    _
  $region15: #{skip_connection_linear.1} parent=0 // pred_check_branch
    %413 = sbr.rel (0) target = $region17
  $region16: #{skip_connection_linear.1} parent=0 // pred_region
    _
  $region17: #{skip_connection_linear.1} parent=0 // pred_fallthru
    _
  // Predicated region
  $region18: #{skip_connection_linear.1} parent=0 // pred_check
    _
  $region19: #{skip_connection_linear.1} parent=0 // pred_check_branch
    %415 = sbr.rel (0) target = $region21
  $region20: #{skip_connection_linear.1} parent=0 // pred_region
    _
  $region21: #{skip_connection_linear.1} parent=0 // pred_fallthru
    _

</llo_original>
